<compile_context>
chip_gen: v5e
topology: v5e:2x2
jax: 0.10.0
libtpu: 0.0.40
codegen_flags: <defaults>
</compile_context>

<pallas_src>
import functools

import jax
import jax.numpy as jnp
from jax.experimental import pallas as pl
from jax.experimental.pallas import tpu as pltpu


def _round_up(x, m):
    return ((x + m - 1) // m) * m


# ----------------------------------------------------------------------------
# Kernel body (static variants selected via functools.partial keywords).
# ----------------------------------------------------------------------------
def _swiglu_kernel(*refs, tj, fuse_gu, single_k):
    if fuse_gu:
        x_ref, wgu_ref, wd_ref, o_ref = refs[:4]
        rest = refs[4:]
    else:
        x_ref, wg_ref, wu_ref, wd_ref, o_ref = refs[:5]
        rest = refs[5:]
    acc_ref = None if single_k else rest[0]

    x = x_ref[...]
    if fuse_gu:
        # One matmul carries both projections; slice at the lane-aligned tj
        # boundary (tj % 128 == 0 is guaranteed by the wrapper on this path).
        gu = jnp.dot(x, wgu_ref[...], preferred_element_type=jnp.float32)
        g = gu[:, :tj]
        u = gu[:, tj:]
    else:
        g = jnp.dot(x, wg_ref[...], preferred_element_type=jnp.float32)
        u = jnp.dot(x, wu_ref[...], preferred_element_type=jnp.float32)

    # SiLU(g) * u in f32 (sigmoid on the EUP), single cast for the down matmul.
    h = (g * jax.nn.sigmoid(g) * u).astype(wd_ref.dtype)
    part = jnp.dot(h, wd_ref[...], preferred_element_type=jnp.float32)

    if single_k:
        # Whole intermediate axis in one step: no accumulator round-trip.
        o_ref[...] = part.astype(o_ref.dtype)
    else:
        j = pl.program_id(1)

        @pl.when(j == 0)
        def _():
            acc_ref[...] = jnp.zeros_like(acc_ref)

        acc_ref[...] += part

        @pl.when(j == pl.num_programs(1) - 1)
        def _():
            o_ref[...] = acc_ref[...].astype(o_ref.dtype)


# ----------------------------------------------------------------------------
# VMEM-budgeted tile selection.
# ----------------------------------------------------------------------------
def _vmem_capacity_bytes():
    try:
        cap = getattr(pltpu.get_tpu_info(), "vmem_capacity_bytes", None)
        if cap:
            return int(cap)
    except Exception:
        pass
    return 64 << 20  # conservative (v7x-sized) default


def _vmem_estimate(tm, tj, hidden, x_bytes, w_bytes, out_bytes, single_k):
    est = (
        2 * tm * hidden * x_bytes             # x tile (double buffered)
        + 2 * hidden * (2 * tj) * w_bytes     # gate+up weight stream (db)
        + 2 * tj * hidden * w_bytes           # down-proj weight tile (db)
        + 2 * tm * hidden * out_bytes         # output tile (db)
        + tm * tj * (3 * 4 + max(w_bytes, 2)) # g/u/product f32 temps + cast h
        + (2 << 20)                           # Mosaic internal scratch headroom
    )
    if not single_k:
        est += tm * hidden * 4                # resident f32 accumulator
    return est


def _choose_tiles(rows, hidden, inter, x_bytes, w_bytes, out_bytes, sublane_min):
    vmem_cap = _vmem_capacity_bytes()
    # Generation-aware scoped-VMEM budget: use most of a 128 MiB part
    # (v5e/v6e); stay conservative on 64 MiB parts (v7x).
    budget = (104 << 20) if vmem_cap >= (96 << 20) else (44 << 20)

    # Lane-dense intermediate-axis tile candidates; fall back to the full axis.
    tj_cands = [c for c in (512, 256, 128) if inter % c == 0] or [inter]

    row_cap = _round_up(rows, sublane_min)
    tm_cands = sorted(
        {t for t in (2048, 1024, 512, 256, 128) if t <= row_cap}
        | ({row_cap} if row_cap <= 4096 else set()),
        reverse=True,
    )
    if not tm_cands:
        tm_cands = [row_cap]

    def fits(tm, tj):
        return _vmem_estimate(
            tm, tj, hidden, x_bytes, w_bytes, out_bytes, single_k=(tj == inter)
        ) <= budget

    def padding_ok(tm):
        pad = _round_up(rows, tm) - rows
        return pad <= max(rows // 8, sublane_min)  # <= ~12.5% wasted rows

    best = None
    for require_pad_ok in (True, False):
        for tm in tm_cands:
            if require_pad_ok and not padding_ok(tm):
                continue
            for tj in tj_cands:           # shrink tj before shrinking tm
                if fits(tm, tj):
                    best = (tm, tj)
                    break
            if best:
                break
        if best:
            break

    if best is None:
        # Escape path so extreme hidden/intermediate sizes still compile.
        # TODO(synk): tile the hidden (output N) axis instead of shrinking tm
        # for very large hidden sizes.
        tj = tj_cands[-1]
        tm = tm_cands[-1]
        while tm > sublane_min and not fits(tm, tj):
            tm = max(sublane_min, _round_up(tm // 2, sublane_min))
        best = (tm, tj)

    tm, tj = best
    est = _vmem_estimate(
        tm, tj, hidden, x_bytes, w_bytes, out_bytes, single_k=(tj == inter)
    )
    return tm, tj, est, vmem_cap


# ----------------------------------------------------------------------------
# Wrapper.
# ----------------------------------------------------------------------------
def swiglu_mlp(x, w_gate, w_up, w_down, *, cast_matmul_inputs_to_bf16=False):
    """Fused SwiGLU MLP: down_proj( silu(x @ w_gate) * (x @ w_up) ).

    x:       (..., hidden)
    w_gate:  (hidden, intermediate)
    w_up:    (hidden, intermediate)
    w_down:  (intermediate, hidden)

    cast_matmul_inputs_to_bf16: optionally run the MXU in bf16 (f32 accumulation
    kept) for f32 models — up to ~3x MXU throughput on v6e/v7x at reduced
    matmul-input precision. Off by default.
    """
    orig_shape = x.shape
    hidden = orig_shape[-1]
    inter = w_gate.shape[1]
    assert w_gate.shape == (hidden, inter), (w_gate.shape, hidden, inter)
    assert w_up.shape == (hidden, inter), (w_up.shape, hidden, inter)
    assert w_down.shape == (inter, hidden), (w_down.shape, inter, hidden)

    out_dtype = x.dtype  # nn.Linear returns the input dtype

    x2d = x.reshape(-1, hidden)
    if cast_matmul_inputs_to_bf16 and x2d.dtype == jnp.float32:
        x2d = x2d.astype(jnp.bfloat16)
        w_gate = w_gate.astype(jnp.bfloat16)
        w_up = w_up.astype(jnp.bfloat16)
        w_down = w_down.astype(jnp.bfloat16)

    rows = x2d.shape[0]
    x_bytes = x2d.dtype.itemsize
    w_bytes = w_gate.dtype.itemsize
    out_bytes = jnp.dtype(out_dtype).itemsize
    # dtype-native sublane floor: 8 (f32) / 16 (bf16) / 32 (int8/fp8)
    sublane_min = max(8, 32 // x_bytes)

    tm, tj, est, vmem_cap = _choose_tiles(
        rows, hidden, inter, x_bytes, w_bytes, out_bytes, sublane_min
    )

    rows_p = _round_up(rows, tm)
    # Megacore / v7x: guarantee >= 2 row tiles for large row counts so both
    # TensorCores get a share of the "parallel" axis.
    if rows > 256 and rows_p // tm == 1:
        tm_half = _round_up((rows_p + 1) // 2, sublane_min)
        rows_p_half = _round_up(rows, tm_half)
        if rows_p_half // tm_half >= 2:
            tm, rows_p = tm_half, rows_p_half

    if rows_p != rows:
        x2d = jnp.pad(x2d, ((0, rows_p - rows), (0, 0)))

    single_k = tj == inter
    fuse_gu = (tj % 128) == 0  # lane-aligned slice of the fused matmul result
    n_j = inter // tj
    num_i = rows_p // tm

    kernel = functools.partial(
        _swiglu_kernel, tj=tj, fuse_gu=fuse_gu, single_k=single_k
    )

    if fuse_gu:
        # Interleave gate/up column tiles so one lane-dense (hidden, 2*tj)
        # block per j step carries both projections (halves weight DMA streams).
        # TODO(synk): in a real model pre-fuse this weight once, not per call.
        wgu = jnp.concatenate(
            [w_gate.reshape(hidden, n_j, tj), w_up.reshape(hidden, n_j, tj)],
            axis=2,
        ).reshape(hidden, 2 * inter)
        weight_args = (wgu,)
    else:
        weight_args = (w_gate, w_up)

    # Explicit vmem limit (v5e scoped default is only 16 MiB), derived from the
    # actual working-set estimate, capped under the physical VMEM of this part.
    vmem_limit = int(min(max(est + est // 4, 32 << 20), vmem_cap * 7 // 8))

    if single_k:
        grid = (num_i,)
        dims = ("parallel",)
        x_spec = pl.BlockSpec((tm, hidden), lambda i: (i, 0))
        out_spec = pl.BlockSpec((tm, hidden), lambda i: (i, 0))
        if fuse_gu:
            w_specs = [pl.BlockSpec((hidden, 2 * tj), lambda i: (0, 0))]
        else:
            w_specs = [
                pl.BlockSpec((hidden, tj), lambda i: (0, 0)),
                pl.BlockSpec((hidden, tj), lambda i: (0, 0)),
            ]
        wd_spec = pl.BlockSpec((tj, hidden), lambda i: (0, 0))
        scratch = []
    else:
        grid = (num_i, n_j)
        dims = ("parallel", "arbitrary")
        x_spec = pl.BlockSpec((tm, hidden), lambda i, j: (i, 0))
        out_spec = pl.BlockSpec((tm, hidden), lambda i, j: (i, 0))
        if fuse_gu:
            w_specs = [pl.BlockSpec((hidden, 2 * tj), lambda i, j: (0, j))]
        else:
            w_specs = [
                pl.BlockSpec((hidden, tj), lambda i, j: (0, j)),
                pl.BlockSpec((hidden, tj), lambda i, j: (0, j)),
            ]
        wd_spec = pl.BlockSpec((tj, hidden), lambda i, j: (j, 0))
        scratch = [pltpu.VMEM((tm, hidden), jnp.float32)]

    out2d = pl.pallas_call(
        kernel,
        out_shape=jax.ShapeDtypeStruct((rows_p, hidden), out_dtype),
        grid_spec=pltpu.PrefetchScalarGridSpec(
            num_scalar_prefetch=0,
            grid=grid,
            in_specs=[x_spec, *w_specs, wd_spec],
            out_specs=out_spec,
            scratch_shapes=scratch,
        ),
        compiler_params=pltpu.CompilerParams(
            dimension_semantics=dims,
            vmem_limit_bytes=vmem_limit,
        ),
    )(x2d, *weight_args, w_down)

    if rows_p != rows:
        out2d = out2d[:rows]
    return out2d.reshape(orig_shape)


def swiglu_mlp_reference(x, w_gate, w_up, w_down):
    g = jnp.dot(x, w_gate)
    u = jnp.dot(x, w_up)
    return jnp.dot(jax.nn.silu(g) * u, w_down)


# ----------------------------------------------------------------------------
# Self-test.
# ----------------------------------------------------------------------------
def _run_case(key, batch, seq, hidden, inter, dtype, tol):
    k1, k2, k3, k4 = jax.random.split(key, 4)
    x = jax.random.normal(k1, (batch, seq, hidden), dtype=jnp.float32)
    w_gate = jax.random.normal(k2, (hidden, inter), jnp.float32) * hidden ** -0.5
    w_up = jax.random.normal(k3, (hidden, inter), jnp.float32) * hidden ** -0.5
    w_down = jax.random.normal(k4, (inter, hidden), jnp.float32) * inter ** -0.5
    x, w_gate, w_up, w_down = (a.astype(dtype) for a in (x, w_gate, w_up, w_down))

    out = swiglu_mlp(x, w_gate, w_up, w_down)
    jax.block_until_ready(out)

    ref = swiglu_mlp_reference(
        x.astype(jnp.float32),
        w_gate.astype(jnp.float32),
        w_up.astype(jnp.float32),
        w_down.astype(jnp.float32),
    )
    assert out.shape == x.shape, (out.shape, x.shape)
    err = float(jnp.max(jnp.abs(out.astype(jnp.float32) - ref)))
    assert err <= tol, (batch, seq, hidden, inter, str(dtype), err)


if __name__ == "__main__":
    # TODO(synk): ACT2FN[config.hidden_act] is hard-coded to SiLU (standard
    # SwiGLU); the pretraining_tp>1 branch is numerically identical to the
    # tp=1 path, so it is not specialized.
    key = jax.random.PRNGKey(0)
    k1, k2, k3 = jax.random.split(key, 3)

    # unfused gate/up, single reduction step (tiny hidden/intermediate)
    _run_case(k1, batch=2, seq=8, hidden=32, inter=64, dtype=jnp.float32, tol=1e-3)
    # fused gate+up weight stream, single reduction step
    _run_case(k2, batch=2, seq=16, hidden=128, inter=256, dtype=jnp.float32, tol=1e-3)
    # fused gate+up, multi-step reduction with resident f32 accumulator
    _run_case(k3, batch=1, seq=16, hidden=128, inter=1024, dtype=jnp.float32, tol=1e-3)

    print("KERNEL_OK")
</pallas_src>

<mosaic_0001>
module attributes {stable_mosaic.version = 11 : i64} {
  func.func @_swiglu_kernel(%arg0: i32, %arg1: memref<16x32xf32, #tpu.memory_space<vmem>>, %arg2: memref<32x64xf32, #tpu.memory_space<vmem>>, %arg3: memref<32x64xf32, #tpu.memory_space<vmem>>, %arg4: memref<64x32xf32, #tpu.memory_space<vmem>>, %arg5: memref<16x32xf32, #tpu.memory_space<vmem>>) attributes {dimension_semantics = [#tpu.dimension_semantics<parallel>], iteration_bounds = array<i64: 1>, scalar_prefetch = 0 : i64, scratch_operands = 0 : i64, tpu.core_type = #tpu.core_type<tc>, window_params = [{transform_indices = @transform_0, window_bounds = array<i64: 16, 32>}, {pipeline_mode = #tpu.pipeline_mode<synchronous>, transform_indices = @transform_1, window_bounds = array<i64: 32, 64>}, {pipeline_mode = #tpu.pipeline_mode<synchronous>, transform_indices = @transform_2, window_bounds = array<i64: 32, 64>}, {pipeline_mode = #tpu.pipeline_mode<synchronous>, transform_indices = @transform_3, window_bounds = array<i64: 64, 32>}, {transform_indices = @transform_4, window_bounds = array<i64: 16, 32>}]} {
    %c0 = arith.constant 0 : index
    %c0_0 = arith.constant 0 : index
    %0 = vector.load %arg1[%c0, %c0_0] : memref<16x32xf32, #tpu.memory_space<vmem>>, vector<16x32xf32>
    %c0_1 = arith.constant 0 : index
    %c0_2 = arith.constant 0 : index
    %1 = vector.load %arg2[%c0_1, %c0_2] : memref<32x64xf32, #tpu.memory_space<vmem>>, vector<32x64xf32>
    %cst = arith.constant dense<0.000000e+00> : vector<16x64xf32>
    %2 = tpu.matmul %0, %1, %cst {dimension_numbers = #tpu.dot_dimension_numbers<[1], [0], [0], [1], [0, 0, 1, 1], [], []>} : vector<16x32xf32>, vector<32x64xf32>, vector<16x64xf32> -> vector<16x64xf32>
    %c0_3 = arith.constant 0 : index
    %c0_4 = arith.constant 0 : index
    %3 = vector.load %arg3[%c0_3, %c0_4] : memref<32x64xf32, #tpu.memory_space<vmem>>, vector<32x64xf32>
    %cst_5 = arith.constant dense<0.000000e+00> : vector<16x64xf32>
    %4 = tpu.matmul %0, %3, %cst_5 {dimension_numbers = #tpu.dot_dimension_numbers<[1], [0], [0], [1], [0, 0, 1, 1], [], []>} : vector<16x32xf32>, vector<32x64xf32>, vector<16x64xf32> -> vector<16x64xf32>
    %5 = arith.negf %2 : vector<16x64xf32>
    %6 = math.exp %5 : vector<16x64xf32>
    %cst_6 = arith.constant 1.000000e+00 : f32
    %7 = vector.broadcast %cst_6 : f32 to vector<16x64xf32>
    %8 = arith.addf %7, %6 : vector<16x64xf32>
    %9 = arith.divf %7, %8 : vector<16x64xf32>
    %10 = arith.mulf %2, %9 : vector<16x64xf32>
    %11 = arith.mulf %10, %4 : vector<16x64xf32>
    %c0_7 = arith.constant 0 : index
    %c0_8 = arith.constant 0 : index
    %12 = vector.load %arg4[%c0_7, %c0_8] : memref<64x32xf32, #tpu.memory_space<vmem>>, vector<64x32xf32>
    %cst_9 = arith.constant dense<0.000000e+00> : vector<16x32xf32>
    %13 = tpu.matmul %11, %12, %cst_9 {dimension_numbers = #tpu.dot_dimension_numbers<[1], [0], [0], [1], [0, 0, 1, 1], [], []>} : vector<16x64xf32>, vector<64x32xf32>, vector<16x32xf32> -> vector<16x32xf32>
    %c0_10 = arith.constant 0 : index
    %c0_11 = arith.constant 0 : index
    %14 = vector.load %arg5[%c0_10, %c0_11] : memref<16x32xf32, #tpu.memory_space<vmem>>, vector<16x32xf32>
    tpu.vector_store %arg5[%c0_10, %c0_11], %13 {strides = array<i32>} : memref<16x32xf32, #tpu.memory_space<vmem>>, vector<16x32xf32>,
    return
  }
  func.func @transform_0(%arg0: i32) -> (i32, i32) {
    %c0_i32 = arith.constant 0 : i32
    %c0_i32_0 = arith.constant 0 : i32
    return %arg0, %c0_i32 : i32, i32
  }
  func.func @transform_1(%arg0: i32) -> (i32, i32) {
    %c0_i32 = arith.constant 0 : i32
    %c0_i32_0 = arith.constant 0 : i32
    %c0_i32_1 = arith.constant 0 : i32
    return %c0_i32, %c0_i32_0 : i32, i32
  }
  func.func @transform_2(%arg0: i32) -> (i32, i32) {
    %c0_i32 = arith.constant 0 : i32
    %c0_i32_0 = arith.constant 0 : i32
    %c0_i32_1 = arith.constant 0 : i32
    return %c0_i32, %c0_i32_0 : i32, i32
  }
  func.func @transform_3(%arg0: i32) -> (i32, i32) {
    %c0_i32 = arith.constant 0 : i32
    %c0_i32_0 = arith.constant 0 : i32
    %c0_i32_1 = arith.constant 0 : i32
    return %c0_i32, %c0_i32_0 : i32, i32
  }
  func.func @transform_4(%arg0: i32) -> (i32, i32) {
    %c0_i32 = arith.constant 0 : i32
    %c0_i32_0 = arith.constant 0 : i32
    return %arg0, %c0_i32 : i32, i32
  }
}

</mosaic_0001>

<llo_original>
// kernel: tpu_custom_call.1
$region0: #{tpu_custom_call.1}
  #allocation0 [shape = 'u32[]', space=smem, size = 0x4, offset = 0x4, fixed_abs, tag = 'smem constant byte address 0x4 - core index']
  #allocation1 [shape = 'u32[72,128]{1,0:T(1,128)}', space=vmem, size = 0x9000, scoped, tag = 'internal scratch']
  %s0 = inlined_call_operand.vmem [shape: f32[16,32], index: 0, kind: input, shape index: {}]
  %s1 = inlined_call_operand.vmem [shape: f32[32,64], index: 1, kind: input, shape index: {}]
  %s2 = inlined_call_operand.vmem [shape: f32[32,64], index: 2, kind: input, shape index: {}]
  %s3 = inlined_call_operand.vmem [shape: f32[64,32], index: 3, kind: input, shape index: {}]
  %s4 = inlined_call_operand.hbm [shape: f32[16,32], index: 4, kind: output, shape index: {}]
  %s5 = sld [smem:[#allocation0]]
  $region26: #{tpu_custom_call.1} parent=0
    _
  %s7 = ssub.s32 1, %s5
  %s8 = scalar_select 0, %s7, %s5
  $region1: #{tpu_custom_call.1} parent=0
    #allocation2 [shape = 'u8[8192]{0}', space=vmem, size = 0x2000, scoped, tag = 'output window, operand 0, single buffered']
    #allocation3 [shape = 's32[1]{0}', space=sflag, size = 0x4, scoped, tag = 'scoped memory for tpu_custom_call.1']
    %9 = vsyncpa [#allocation3], 0
    // Predicated region
    $region2: #{tpu_custom_call.1} parent=1 // pred_check
      _
    $region3: #{tpu_custom_call.1} parent=1 // pred_check_branch
      %11 = sbr.rel (0) target = $region5
    $region4: #{tpu_custom_call.1} parent=1 // pred_region
      _
    $region5: #{tpu_custom_call.1} parent=1 // pred_fallthru
      _
    // Predicated region
    $region6: #{tpu_custom_call.1} parent=1 // pred_check
      _
    $region7: #{tpu_custom_call.1} parent=1 // pred_check_branch
      %13 = sbr.rel (0) target = $region9
    $region8: #{tpu_custom_call.1} parent=1 // pred_region
      _
    $region9: #{tpu_custom_call.1} parent=1 // pred_fallthru
      _
    // Predicated region
    $region10: #{tpu_custom_call.1} parent=1 // pred_check
      _
    $region11: #{tpu_custom_call.1} parent=1 // pred_check_branch
      %15 = sbr.rel (0) target = $region13
    $region12: #{tpu_custom_call.1} parent=1 // pred_region
      _
    $region13: #{tpu_custom_call.1} parent=1 // pred_fallthru
      _
    // Predicated region
    $region14: #{tpu_custom_call.1} parent=1 // pred_check
      _
    $region15: #{tpu_custom_call.1} parent=1 // pred_check_branch
      %17 = sbr.rel (0) target = $region17
    $region16: #{tpu_custom_call.1} parent=1 // pred_region
      _
    $region17: #{tpu_custom_call.1} parent=1 // pred_fallthru
      _
    %v18 = vld [vmem:[%s0] sm:$0xff]
    %v19 = vld [vmem:[%s0 + $0x8] sm:$0xff]
    %v20 = vld [vmem:[%s1] sm:$0xff]
    %v21 = vld [vmem:[%s1 + $0x8] sm:$0xff]
    %v22 = vld [vmem:[%s1 + $0x10] sm:$0xff]
    %v23 = vld [vmem:[%s1 + $0x18] sm:$0xff]
    %vm24 = vcmask 261120
    %v26 = vsel %vm24, %v18, 0
    %v29 = vsel %vm24, %v19, 0
    %31 = vmatpush.msra.mxu0 0.0
    %32 = vmatpush.msra.mxu0 0.0
    %33 = vmatpush.msra.mxu0 0.0
    %34 = vmatpush.msra.mxu0 0.0
    %35 = vmatpush.msra.mxu0 0.0
    %36 = vmatpush.msra.mxu0 0.0
    %37 = vmatpush.msra.mxu0 0.0
    %38 = vmatpush.msra.mxu0 0.0
    %39 = vmatpush.msra.mxu0 0.0
    %40 = vmatpush.msra.mxu0 0.0
    %41 = vmatpush.msra.mxu0 0.0
    %42 = vmatpush.msra.mxu0 0.0
    %43 = vmatpush.msra.mxu0 %v23
    %44 = vmatpush.msra.mxu0 %v22
    %45 = vmatpush.msra.mxu0 %v21
    %46 = vmatpush.msra.mxu0 %v20
    %47 = vmatmul.f32.gmra.mxu0 %v26
    %v48 = vpop.f32.mrf.mxu0
    %v49 = vadd.f32 0.0, %v48
    %50 = vmatmul.f32.gmra.mxu0 %v29
    %v51 = vpop.f32.mrf.mxu0
    %v52 = vadd.f32 0.0, %v51
    %53 = vdwg.mxu0
    %v54 = vld [vmem:[%s2] sm:$0xff]
    %v55 = vld [vmem:[%s2 + $0x8] sm:$0xff]
    %v56 = vld [vmem:[%s2 + $0x10] sm:$0xff]
    %v57 = vld [vmem:[%s2 + $0x18] sm:$0xff]
    %58 = vmatpush.msra.mxu0 0.0
    %59 = vmatpush.msra.mxu0 0.0
    %60 = vmatpush.msra.mxu0 0.0
    %61 = vmatpush.msra.mxu0 0.0
    %62 = vmatpush.msra.mxu0 0.0
    %63 = vmatpush.msra.mxu0 0.0
    %64 = vmatpush.msra.mxu0 0.0
    %65 = vmatpush.msra.mxu0 0.0
    %66 = vmatpush.msra.mxu0 0.0
    %67 = vmatpush.msra.mxu0 0.0
    %68 = vmatpush.msra.mxu0 0.0
    %69 = vmatpush.msra.mxu0 0.0
    %70 = vmatpush.msra.mxu0 %v57
    %71 = vmatpush.msra.mxu0 %v56
    %72 = vmatpush.msra.mxu0 %v55
    %73 = vmatpush.msra.mxu0 %v54
    %74 = vmatmul.f32.gmra.mxu0 %v26
    %v75 = vpop.f32.mrf.mxu0
    %v76 = vadd.f32 0.0, %v75
    %77 = vmatmul.f32.gmra.mxu0 %v29
    %v78 = vpop.f32.mrf.mxu0
    %v79 = vadd.f32 0.0, %v78
    %80 = vdwg.mxu0
    %v81 = vxor.u32 %v49, 2147483648
    %v82 = vxor.u32 %v52, 2147483648
    %v83 = vmul.f32 %v81, 1.442695
    %v84 = vpow.pop %v83
    %v85 = vmul.f32 %v82, 1.442695
    %v86 = vpow.pop %v85
    %v87 = vadd.f32 %v84, 1.0
    %v88 = vadd.f32 %v86, 1.0
    %v89 = vrcp.pop %v87
    %v90 = vmul.f32 %v87, %v89
    %v91 = vsub.f32 1.0, %v90
    %v92 = vmul.f32 %v89, %v91
    %v93 = vadd.f32 %v89, %v92
    %vm94 = vweird.f32 %v87
    %vm95 = vweird.f32 %v89
    %vm96 = vmor %vm94, %vm95
    %v97 = vsel %vm96, %v89, %v93
    %v98 = vand.u32 2147483647, %v87
    %vm99 = vcmp.eq.f32.partialorder %v98, 8.507059e+37
    %v100 = vand.u32 %v87, 2147483648
    %v101 = vor.u32 1.1754944e-38, %v100
    %v102 = vsel %vm99, %v101, %v97
    %v103 = vmul.f32 1.0, %v102
    %v104 = vrcp.pop %v88
    %v105 = vmul.f32 %v88, %v104
    %v106 = vsub.f32 1.0, %v105
    %v107 = vmul.f32 %v104, %v106
    %v108 = vadd.f32 %v104, %v107
    %vm109 = vweird.f32 %v88
    %vm110 = vweird.f32 %v104
    %vm111 = vmor %vm109, %vm110
    %v112 = vsel %vm111, %v104, %v108
    %v113 = vand.u32 2147483647, %v88
    %vm114 = vcmp.eq.f32.partialorder %v113, 8.507059e+37
    %v115 = vand.u32 %v88, 2147483648
    %v116 = vor.u32 1.1754944e-38, %v115
    %v117 = vsel %vm114, %v116, %v112
    %v118 = vmul.f32 1.0, %v117
    %v119 = vmul.f32 %v49, %v103
    %v120 = vmul.f32 %v52, %v118
    %v121 = vmul.f32 %v119, %v76
    %v122 = vmul.f32 %v120, %v79
    %v123 = vld [vmem:[%s3] sm:$0xff]
    %v124 = vld [vmem:[%s3 + $0x8] sm:$0xff]
    %v125 = vld [vmem:[%s3 + $0x10] sm:$0xff]
    %v126 = vld [vmem:[%s3 + $0x18] sm:$0xff]
    %v127 = vld [vmem:[%s3 + $0x20] sm:$0xff]
    %v128 = vld [vmem:[%s3 + $0x28] sm:$0xff]
    %v129 = vld [vmem:[%s3 + $0x30] sm:$0xff]
    %v130 = vld [vmem:[%s3 + $0x38] sm:$0xff]
    %vm131 = vcmask 523264
    %v133 = vsel %vm131, %v121, 0
    %v136 = vsel %vm131, %v122, 0
    %138 = vmatpush.msra.mxu0 0.0
    %139 = vmatpush.msra.mxu0 0.0
    %140 = vmatpush.msra.mxu0 0.0
    %141 = vmatpush.msra.mxu0 0.0
    %142 = vmatpush.msra.mxu0 0.0
    %143 = vmatpush.msra.mxu0 0.0
    %144 = vmatpush.msra.mxu0 0.0
    %145 = vmatpush.msra.mxu0 0.0
    %146 = vmatpush.msra.mxu0 %v130
    %147 = vmatpush.msra.mxu0 %v129
    %148 = vmatpush.msra.mxu0 %v128
    %149 = vmatpush.msra.mxu0 %v127
    %150 = vmatpush.msra.mxu0 %v126
    %151 = vmatpush.msra.mxu0 %v125
    %152 = vmatpush.msra.mxu0 %v124
    %153 = vmatpush.msra.mxu0 %v123
    %154 = vmatmul.f32.gmra.mxu0 %v133
    %v155 = vpop.f32.mrf.mxu0
    %v156 = vadd.f32 0.0, %v155
    %157 = vmatmul.f32.gmra.mxu0 %v136
    %v158 = vpop.f32.mrf.mxu0
    %v159 = vadd.f32 0.0, %v158
    %160 = vdwg.mxu0
    %161 = vst.msk [vmem:[#allocation2] sm:$0xff] %vm24, %v156
    %162 = vst.msk [vmem:[#allocation2 + $0x8] sm:$0xff] %vm24, %v159
    // Predicated region
    $region18: #{tpu_custom_call.1} parent=1 // pred_check
      _
    $region19: #{tpu_custom_call.1} parent=1 // pred_check_branch
      %164 = sbr.rel (0) target = $region21
    $region20: #{tpu_custom_call.1} parent=1 // pred_region
      %166 = vsyncadd [#allocation3], 0
      %s167 = sshll.u32 [#allocation2], 4
      %s168 = int_to_ptr.vmem [resolvable:$true] %s167
      %s169 = sshll.u32 %s4, 4
      %s170 = int_to_ptr.hbm [resolvable:$true] %s169
      %175 = dma.vmem_to_hbm [thread:$0]  %s168, 256, %s170, [#allocation3], 128, 128, 8
    $region21: #{tpu_custom_call.1} parent=1 // pred_fallthru
      _
    // Predicated region
    $region22: #{tpu_custom_call.1} parent=1 // pred_check
      _
    $region23: #{tpu_custom_call.1} parent=1 // pred_check_branch
      %177 = sbr.rel (0) target = $region25
    $region24: #{tpu_custom_call.1} parent=1 // pred_region
      %179 = dma.done [#allocation3], 256
    $region25: #{tpu_custom_call.1} parent=1 // pred_fallthru
      _
    %180 = vsyncpa [#allocation3], 1

</llo_original>
